<compile_context>
chip_gen: v5e
topology: v5e:2x2
jax: 0.10.0
libtpu: 0.0.40
codegen_flags: <defaults>
</compile_context>

<pallas_src>
import functools

import jax
import jax.numpy as jnp
from jax import lax
from jax.experimental import pallas as pl
from jax.experimental.pallas import tpu as pltpu


def _atom_reduce_kernel(x_ref, ids_ref, out_ref, acc_ref, iota_ref, *,
                        constant, tile_graphs):
    """One (core-split, atom-tile) grid step of the masked segment sum."""
    a_idx = pl.program_id(1)                       # atom (reduction) axis, innermost

    @pl.when(a_idx == 0)
    def _init():
        acc_ref[...] = jnp.zeros_like(acc_ref)
        # Sublane iota cached once per split; reused by every atom tile (saves one VALU op
        # per big-slab vreg per tile vs. regenerating it).
        iota_ref[...] = lax.broadcasted_iota(jnp.int32, iota_ref.shape, 0)

    x_t = x_ref[...].astype(jnp.float32)           # (F, TILE_N)   atoms on lanes
    ids = ids_ref[...]                             # (1, TILE_N)   int32, atoms on lanes
    g_iota = iota_ref[...]                         # (TILE_G, TILE_N) cached 0..TILE_G-1 per sublane

    g_pad = acc_ref.shape[-1]
    n_sub = g_pad // tile_graphs                   # static

    # Loop graph sub-tiles inside the kernel: x / ids are read from HBM exactly once.
    for g_sub in range(n_sub):
        g_base = g_sub * tile_graphs
        # Move the g_base offset onto the cheap (1, TILE_N) row instead of the big slab.
        ids_local = ids - g_base
        # mask_t[g, i] = 1.0 iff atom i belongs to graph (g_base + g): compare + cast only.
        mask_t = (ids_local == g_iota).astype(jnp.float32)     # (TILE_G, TILE_N)
        # MXU contraction over the atom axis (A @ B^T): graphs stay on the lane axis.
        acc_ref[:, g_base:g_base + tile_graphs] += lax.dot_general(
            x_t, mask_t,
            dimension_numbers=(((1,), (1,)), ((), ())),
            preferred_element_type=jnp.float32,
        )

    @pl.when(a_idx == pl.num_programs(1) - 1)
    def _finalize():
        out_ref[...] = (acc_ref[...] * constant).astype(out_ref.dtype)


def atom_reduce(x, batch, num_graphs, *, constant=1.0, reduce="sum",
                tile_atoms=8192, tile_graphs=128, num_splits=2):
    """Pallas equivalent of AtomReduce.forward (batch-data path)."""
    if reduce != "sum":
        raise NotImplementedError("only reduce='sum' is supported")

    x = jnp.asarray(x)
    if x.ndim == 1:
        x = x[:, None]
    n_atoms, feat = x.shape
    batch = jnp.asarray(batch, dtype=jnp.int32)

    def _r128(v):
        return ((max(int(v), 128) + 127) // 128) * 128

    tile_graphs = _r128(tile_graphs)
    g_pad = ((num_graphs + tile_graphs - 1) // tile_graphs) * tile_graphs

    # Don't tile wider than the (128-rounded) atom count.
    tile_atoms = _r128(min(int(tile_atoms), _r128(n_atoms)))

    feat_pad = ((feat + 7) // 8) * 8
    x_itemsize = jnp.dtype(x.dtype).itemsize

    def _vmem_estimate(t_atoms):
        return (
            2 * feat_pad * t_atoms * x_itemsize      # x tiles, double-buffered
            + 2 * 8 * t_atoms * 4                    # ids tiles, double-buffered
            + tile_graphs * t_atoms * 4              # cached iota scratch
            + 3 * tile_graphs * t_atoms * 4          # mask compare/cast/matmul temporaries
            + feat_pad * g_pad * 4                   # resident f32 accumulator
            + 2 * feat_pad * g_pad * 4               # partial-output block, double-buffered
        )

    # Stay under a v7x-safe 64 MiB scoped-VMEM cap (with 2x headroom on the estimate);
    # v5e/v6e (128 MiB physical) get the same generous explicit limit.
    VMEM_CAP = 64 * 1024 * 1024
    while tile_atoms > 512 and 2 * _vmem_estimate(tile_atoms) > VMEM_CAP:
        tile_atoms //= 2
    vmem_limit = int(min(max(2 * _vmem_estimate(tile_atoms), 8 * 1024 * 1024), VMEM_CAP))

    n_atom_tiles = pl.cdiv(n_atoms, tile_atoms)
    num_splits = max(1, min(int(num_splits), n_atom_tiles))
    tiles_per_split = pl.cdiv(n_atom_tiles, num_splits)
    n_pad = num_splits * tiles_per_split * tile_atoms

    # Lane-dense layouts: atoms on the last (lane) axis.
    # TODO(synk): for feat > 1 this transpose materializes an extra (F, N) HBM copy; have the
    #             producer emit (F, N) directly in that case. For feat == 1 it is a free reshape.
    x_t = jnp.transpose(x)                                            # (F, N)
    x_t = jnp.pad(x_t, ((0, 0), (0, n_pad - n_atoms)))                # pad atoms with 0.0
    ids = jnp.pad(batch, (0, n_pad - n_atoms), constant_values=-1)    # -1 matches no graph
    ids = ids[None, :]                                                # (1, N_pad)

    kernel = functools.partial(_atom_reduce_kernel, constant=float(constant),
                               tile_graphs=tile_graphs)

    partials = pl.pallas_call(
        kernel,
        out_shape=jax.ShapeDtypeStruct((num_splits, feat, g_pad), jnp.float32),
        grid_spec=pltpu.PrefetchScalarGridSpec(
            num_scalar_prefetch=0,
            grid=(num_splits, tiles_per_split),          # atoms (reduction) innermost
            in_specs=[
                pl.BlockSpec((feat, tile_atoms),
                             lambda s, a: (0, s * tiles_per_split + a)),   # x^T tile
                pl.BlockSpec((1, tile_atoms),
                             lambda s, a: (0, s * tiles_per_split + a)),   # ids tile
            ],
            out_specs=pl.BlockSpec((None, feat, g_pad), lambda s, a: (s, 0, 0)),
            scratch_shapes=[
                pltpu.VMEM((feat, g_pad), jnp.float32),            # resident accumulator
                pltpu.VMEM((tile_graphs, tile_atoms), jnp.int32),  # cached sublane iota
            ],
        ),
        compiler_params=pltpu.CompilerParams(
            dimension_semantics=("parallel", "arbitrary"),
            vmem_limit_bytes=vmem_limit,
        ),
    )(x_t, ids)

    out_t = partials.sum(axis=0)                                      # (F, g_pad), f32
    out = jnp.transpose(out_t[:, :num_graphs]).astype(x.dtype)        # (num_graphs, F)
    # torch .squeeze(1): only squeezes when the feature dim is size 1.
    if out.shape[1] == 1:
        out = out.squeeze(1)
    return out


if __name__ == "__main__":
    key = jax.random.PRNGKey(0)
    kx, kb = jax.random.split(key)

    # Small synthetic AtomGraph batch: 300 atoms, 5 graphs, per-atom scalar energy.
    n_atoms = 300
    num_graphs = 5
    constant = 0.5

    x = jax.random.normal(kx, (n_atoms, 1), dtype=jnp.float32)                   # atomic energies [N, 1]
    batch = jax.random.randint(kb, (n_atoms,), 0, num_graphs, dtype=jnp.int32)   # unsorted graph ids

    # Reference (mirrors torch_scatter.scatter reduce='sum').
    ref = (jax.ops.segment_sum(x, batch, num_segments=num_graphs) * constant).squeeze(1)

    # Small tiles: exercises the core-split "parallel" axis, ragged last tile and accumulator path.
    out_small = atom_reduce(x, batch, num_graphs, constant=constant,
                            reduce="sum", tile_atoms=128, num_splits=2)
    out_small = jax.block_until_ready(out_small)
    assert out_small.shape == (num_graphs,)
    assert jnp.allclose(out_small, ref, atol=1e-4, rtol=1e-4), (out_small, ref)

    # Default (large-tile, single-pass) configuration.
    out_big = atom_reduce(x, batch, num_graphs, constant=constant, reduce="sum")
    out_big = jax.block_until_ready(out_big)
    assert out_big.shape == (num_graphs,)
    assert jnp.allclose(out_big, ref, atol=1e-4, rtol=1e-4), (out_big, ref)

    print("KERNEL_OK")
</pallas_src>

<mosaic_0001>
module attributes {stable_mosaic.version = 11 : i64} {
  func.func @_atom_reduce_kernel(%arg0: i32, %arg1: i32, %arg2: memref<1x128xf32, #tpu.memory_space<vmem>>, %arg3: memref<1x128xi32, #tpu.memory_space<vmem>>, %arg4: memref<1x1x128xf32, #tpu.memory_space<vmem>>, %arg5: memref<1x128xf32, #tpu.memory_space<vmem>>, %arg6: memref<128x128xi32, #tpu.memory_space<vmem>>) attributes {dimension_semantics = [#tpu.dimension_semantics<parallel>, #tpu.dimension_semantics<arbitrary>], iteration_bounds = array<i64: 2, 2>, scalar_prefetch = 0 : i64, scratch_operands = 2 : i64, tpu.core_type = #tpu.core_type<tc>, window_params = [{transform_indices = @transform_0, window_bounds = array<i64: 1, 128>}, {transform_indices = @transform_1, window_bounds = array<i64: 1, 128>}, {transform_indices = @transform_2, window_bounds = array<i64: 1, 1, 128>}]} {
    %c0_i32 = arith.constant 0 : i32
    %0 = arith.cmpi eq, %arg1, %c0_i32 : i32
    %1 = arith.extui %0 : i1 to i32
    %c0_i32_0 = arith.constant 0 : i32
    %2 = arith.cmpi ne, %1, %c0_i32_0 : i32
    scf.if %2 {
      %cst_12 = arith.constant 0.000000e+00 : f32
      %19 = vector.broadcast %cst_12 : f32 to vector<1x128xf32>
      %c0_13 = arith.constant 0 : index
      %c0_14 = arith.constant 0 : index
      %20 = vector.load %arg5[%c0_13, %c0_14] : memref<1x128xf32, #tpu.memory_space<vmem>>, vector<1x128xf32>
      tpu.vector_store %arg5[%c0_13, %c0_14], %19 {strides = array<i32>} : memref<1x128xf32, #tpu.memory_space<vmem>>, vector<1x128xf32>,
      %21 = tpu.iota {dimensions = array<i32: 0>} : vector<128x128xi32>
      %c0_15 = arith.constant 0 : index
      %c0_16 = arith.constant 0 : index
      %22 = vector.load %arg6[%c0_15, %c0_16] : memref<128x128xi32, #tpu.memory_space<vmem>>, vector<128x128xi32>
      tpu.vector_store %arg6[%c0_15, %c0_16], %21 {strides = array<i32>} : memref<128x128xi32, #tpu.memory_space<vmem>>, vector<128x128xi32>,
    } else {
    }
    %c0 = arith.constant 0 : index
    %c0_1 = arith.constant 0 : index
    %3 = vector.load %arg2[%c0, %c0_1] : memref<1x128xf32, #tpu.memory_space<vmem>>, vector<1x128xf32>
    %c0_2 = arith.constant 0 : index
    %c0_3 = arith.constant 0 : index
    %4 = vector.load %arg3[%c0_2, %c0_3] : memref<1x128xi32, #tpu.memory_space<vmem>>, vector<1x128xi32>
    %c0_4 = arith.constant 0 : index
    %c0_5 = arith.constant 0 : index
    %5 = vector.load %arg6[%c0_4, %c0_5] : memref<128x128xi32, #tpu.memory_space<vmem>>, vector<128x128xi32>
    %c0_i32_6 = arith.constant 0 : i32
    %6 = vector.broadcast %c0_i32_6 : i32 to vector<1x128xi32>
    %7 = arith.subi %4, %6 : vector<1x128xi32>
    %8 = vector.broadcast %7 : vector<1x128xi32> to vector<128x128xi32>
    %9 = arith.cmpi eq, %8, %5 : vector<128x128xi32>
    %10 = arith.extui %9 : vector<128x128xi1> to vector<128x128xi32>
    %11 = arith.sitofp %10 : vector<128x128xi32> to vector<128x128xf32>
    %c0_7 = arith.constant 0 : index
    %c0_8 = arith.constant 0 : index
    %12 = vector.load %arg5[%c0_7, %c0_8] : memref<1x128xf32, #tpu.memory_space<vmem>>, vector<1x128xf32>
    %cst = arith.constant dense<0.000000e+00> : vector<1x128xf32>
    %13 = tpu.matmul %3, %11, %cst {dimension_numbers = #tpu.dot_dimension_numbers<[1], [1], [0], [0], [0, 0, 1, 0], [], []>} : vector<1x128xf32>, vector<128x128xf32>, vector<1x128xf32> -> vector<1x128xf32>
    %14 = arith.addf %12, %13 : vector<1x128xf32>
    %c0_9 = arith.constant 0 : index
    %c0_10 = arith.constant 0 : index
    %15 = vector.load %arg5[%c0_9, %c0_10] : memref<1x128xf32, #tpu.memory_space<vmem>>, vector<1x128xf32>
    tpu.vector_store %arg5[%c0_9, %c0_10], %14 {strides = array<i32>} : memref<1x128xf32, #tpu.memory_space<vmem>>, vector<1x128xf32>,
    %c1_i32 = arith.constant 1 : i32
    %16 = arith.cmpi eq, %arg1, %c1_i32 : i32
    %17 = arith.extui %16 : i1 to i32
    %c0_i32_11 = arith.constant 0 : i32
    %18 = arith.cmpi ne, %17, %c0_i32_11 : i32
    scf.if %18 {
      %c0_12 = arith.constant 0 : index
      %c0_13 = arith.constant 0 : index
      %19 = vector.load %arg5[%c0_12, %c0_13] : memref<1x128xf32, #tpu.memory_space<vmem>>, vector<1x128xf32>
      %cst_14 = arith.constant 5.000000e-01 : f32
      %20 = vector.broadcast %cst_14 : f32 to vector<1x128xf32>
      %21 = arith.mulf %19, %20 : vector<1x128xf32>
      %c0_15 = arith.constant 0 : index
      %c0_16 = arith.constant 0 : index
      %c0_17 = arith.constant 0 : index
      %22 = vector.load %arg4[%c0_15, %c0_16, %c0_17] : memref<1x1x128xf32, #tpu.memory_space<vmem>>, vector<1x1x128xf32>
      %23 = vector.shape_cast %22 : vector<1x1x128xf32> to vector<1x128xf32>
      %24 = vector.shape_cast %21 : vector<1x128xf32> to vector<1x1x128xf32>
      tpu.vector_store %arg4[%c0_15, %c0_16, %c0_17], %24 {strides = array<i32>} : memref<1x1x128xf32, #tpu.memory_space<vmem>>, vector<1x1x128xf32>,
    } else {
    }
    return
  }
  func.func @transform_0(%arg0: i32, %arg1: i32) -> (i32, i32) {
    %c2_i32 = arith.constant 2 : i32
    %0 = arith.muli %arg0, %c2_i32 : i32
    %1 = arith.addi %0, %arg1 : i32
    %c0_i32 = arith.constant 0 : i32
    %c0_i32_0 = arith.constant 0 : i32
    return %c0_i32, %1 : i32, i32
  }
  func.func @transform_1(%arg0: i32, %arg1: i32) -> (i32, i32) {
    %c2_i32 = arith.constant 2 : i32
    %0 = arith.muli %arg0, %c2_i32 : i32
    %1 = arith.addi %0, %arg1 : i32
    %c0_i32 = arith.constant 0 : i32
    %c0_i32_0 = arith.constant 0 : i32
    return %c0_i32, %1 : i32, i32
  }
  func.func @transform_2(%arg0: i32, %arg1: i32) -> (i32, i32, i32) {
    %c0_i32 = arith.constant 0 : i32
    %c0_i32_0 = arith.constant 0 : i32
    %c0_i32_1 = arith.constant 0 : i32
    return %arg0, %c0_i32, %c0_i32_0 : i32, i32, i32
  }
}

</mosaic_0001>

<llo_original>
// kernel: tpu_custom_call.1
$region0: #{tpu_custom_call.1}
  #allocation0 [shape = 'u32[]', space=smem, size = 0x4, offset = 0x4, fixed_abs, tag = 'smem constant byte address 0x4 - core index']
  #allocation1 [shape = 'u32[72,128]{1,0:T(1,128)}', space=vmem, size = 0x9000, scoped, tag = 'internal scratch']
  #allocation2 [shape = 'f32[1,128]{1,0:T(1,128)}', space=vmem, size = 0x200, scoped, tag = 'scratch operand']
  #allocation3 [shape = 's32[128,128]{1,0:T(8,128)}', space=vmem, size = 0x10000, scoped, tag = 'scratch operand']
  %s0 = inlined_call_operand.hbm [shape: f32[1,512], index: 0, kind: input, shape index: {}]
  %s1 = inlined_call_operand.hbm [shape: s32[1,512], index: 1, kind: input, shape index: {}]
  %s2 = inlined_call_operand.hbm [shape: f32[2,1,128], index: 2, kind: output, shape index: {}]
  %s3 = sld [smem:[#allocation0]]
  $region57: #{tpu_custom_call.1} parent=0
    _
  %s5 = ssub.s32 1, %s3
  %s6 = scalar_select 0, %s5, %s3
  $region1: #{tpu_custom_call.1} parent=0
    #allocation4 [shape = 'u8[1024]{0}', space=vmem, size = 0x400, scoped, tag = 'input window, operand 0']
    #allocation5 [shape = 's32[2]{0}', space=sflag, size = 0x8, scoped, tag = 'scoped memory for tpu_custom_call.1']
    #allocation6 [shape = 's32[2]{0}', space=sflag, size = 0x8, scoped, tag = 'scoped memory for tpu_custom_call.1']
    #allocation7 [shape = 'u8[1024]{0}', space=vmem, size = 0x400, scoped, tag = 'input window, operand 1']
    #allocation8 [shape = 's32[2]{0}', space=sflag, size = 0x8, scoped, tag = 'scoped memory for tpu_custom_call.1']
    #allocation9 [shape = 'u8[1024]{0}', space=vmem, size = 0x400, scoped, tag = 'output window, operand 0']
    %7 = vsyncpa [#allocation5], 0
    %s8 = scalar_lea.sflag [#allocation5], 1
    %9 = vsyncpa %s8, 0
    %10 = vsyncpa [#allocation8], 0
    %s11 = scalar_lea.sflag [#allocation8], 1
    %12 = vsyncpa %s11, 0
    %13 = vsyncpa [#allocation6], 0
    %s14 = scalar_lea.sflag [#allocation6], 1
    %15 = vsyncpa %s14, 0
    loop: start=0, step=1, limit=6
    $region2: #{tpu_custom_call.1} parent=1 // loop_pre_header
      _
    $region3: #{tpu_custom_call.1} parent=1 // loop_header
      %s17 = sphi 0, %s21
      %p18 = scmp.ge.s32.totalorder %s17, 6
      %s24 = sphi 0, %s36
      %s25 = sphi 0, %s32
      %s26 = sphi 0, %s24
      %s27 = sphi 0, %s25
      %s28 = sphi 0, %s26
      %s29 = sphi 0, %s27
      %s43 = sphi 0, %s45
      %s46 = sphi 0, %s43
      %s47 = sphi 0, %s46
      %s63 = sphi 0, %s47
      %s73 = sphi 0, %s75
      %s76 = sphi 0, %s73
      %s77 = sphi 0, %s76
      %s93 = sphi 0, %s77
      %s99 = sphi 0, %s101
      %s102 = sphi 0, %s99
      %s103 = sphi 0, %s102
      %s119 = sphi 0, %s103
    $region4: #{tpu_custom_call.1} parent=1 // loop_header_branch
      %20 = sbr.rel (%p18) target = $region8
    $region5: #{tpu_custom_call.1} parent=1 // loop_body
      %s22 = ssub.s32 %s17, 1
      %s23 = ssub.s32 %s17, 2
      %s30 = sadd.s32 1, %s25
      %p31 = scmp.ge.s32.totalorder %s30, 2
      %s32 = scalar_select %p31, 0, %s30
      %s33 = sadd.s32 1, %s24
      %s34 = scalar_select %p31, %s33, %s24
      %p35 = scmp.ge.s32.totalorder %s34, 2
      %s36 = scalar_select %p35, 0, %s34
      %s37 = smul.u32 %s24, 2
      %s38 = sadd.s32 %s37, %s25
      %s39 = smul.u32 %s36, 2
      %s40 = sadd.s32 %s39, %s32
      %s41 = ssub.s32 %s38, %s40
      %p42 = scmp.eq.s32.totalorder %s41, 0
      %s44 = sadd.s32 %s43, 1
      %s45 = scalar_select %p42, %s43, %s44
      %p48 = pneg %p42
      %p49 = scmp.eq.s32.totalorder %s17, 3
      %p50 = por %p48, %p49
      %p51 = scmp.ne.s32.totalorder %s43, %s46
      %p52 = scmp.eq.s32.totalorder %s17, 0
      %p53 = por %p51, %p52
      %p54 = scmp.ne.s32.totalorder %s43, %s46
      %p55 = scmp.eq.s32.totalorder %s22, 3
      %p56 = por %p54, %p55
      %p57 = scmp.ne.s32.totalorder %s46, %s47
      %p58 = scmp.eq.s32.totalorder %s22, 0
      %p59 = por %p57, %p58
      %p60 = scmp.ne.s32.totalorder %s46, %s47
      %p61 = scmp.eq.s32.totalorder %s23, 3
      %p62 = por %p60, %p61
      %p64 = scmp.ne.s32.totalorder %s47, %s63
      %p65 = scmp.eq.s32.totalorder %s23, 0
      %p66 = por %p64, %p65
      %s67 = smul.u32 %s24, 2
      %s68 = sadd.s32 %s67, %s25
      %s69 = smul.u32 %s36, 2
      %s70 = sadd.s32 %s69, %s32
      %s71 = ssub.s32 %s68, %s70
      %p72 = scmp.eq.s32.totalorder %s71, 0
      %s74 = sadd.s32 %s73, 1
      %s75 = scalar_select %p72, %s73, %s74
      %p78 = pneg %p72
      %p79 = scmp.eq.s32.totalorder %s17, 3
      %p80 = por %p78, %p79
      %p81 = scmp.ne.s32.totalorder %s73, %s76
      %p82 = scmp.eq.s32.totalorder %s17, 0
      %p83 = por %p81, %p82
      %p84 = scmp.ne.s32.totalorder %s73, %s76
      %p85 = scmp.eq.s32.totalorder %s22, 3
      %p86 = por %p84, %p85
      %p87 = scmp.ne.s32.totalorder %s76, %s77
      %p88 = scmp.eq.s32.totalorder %s22, 0
      %p89 = por %p87, %p88
      %p90 = scmp.ne.s32.totalorder %s76, %s77
      %p91 = scmp.eq.s32.totalorder %s23, 3
      %p92 = por %p90, %p91
      %p94 = scmp.ne.s32.totalorder %s77, %s93
      %p95 = scmp.eq.s32.totalorder %s23, 0
      %p96 = por %p94, %p95
      %s97 = ssub.s32 %s24, %s36
      %p98 = scmp.eq.s32.totalorder %s97, 0
      %s100 = sadd.s32 %s99, 1
      %s101 = scalar_select %p98, %s99, %s100
      %p104 = pneg %p98
      %p105 = scmp.eq.s32.totalorder %s17, 3
      %p106 = por %p104, %p105
      %p107 = scmp.ne.s32.totalorder %s99, %s102
      %p108 = scmp.eq.s32.totalorder %s17, 0
      %p109 = por %p107, %p108
      %p110 = scmp.ne.s32.totalorder %s99, %s102
      %p111 = scmp.eq.s32.totalorder %s22, 3
      %p112 = por %p110, %p111
      %p113 = scmp.ne.s32.totalorder %s102, %s103
      %p114 = scmp.eq.s32.totalorder %s22, 0
      %p115 = por %p113, %p114
      %p116 = scmp.ne.s32.totalorder %s102, %s103
      %p117 = scmp.eq.s32.totalorder %s23, 3
      %p118 = por %p116, %p117
      %p120 = scmp.ne.s32.totalorder %s103, %s119
      %p121 = scmp.eq.s32.totalorder %s23, 0
      %p122 = por %p120, %p121
      %p123 = scmp.le.s32.totalorder 1, %s17
      %p124 = scmp.lt.s32.totalorder %s17, 5
      %p125 = pnand %p123, %p124
      %p126 = pneg %p125
      // Predicated region
      $region9: #{tpu_custom_call.1} parent=5 // pred_check
        _
      $region10: #{tpu_custom_call.1} parent=5 // pred_check_branch
        %128 = sbr.rel (%p125) target = $region12
      $region11: #{tpu_custom_call.1} parent=5 // pred_region
        %s129 = ssub.s32 %s17, 1
      $region12: #{tpu_custom_call.1} parent=5 // pred_fallthru
        _
      %p130 = scmp.lt.s32.totalorder %s17, 4
      // Predicated region
      $region13: #{tpu_custom_call.1} parent=5 // pred_check
        %p131 = pneg %p130
      $region14: #{tpu_custom_call.1} parent=5 // pred_check_branch
        %133 = sbr.rel (%p131) target = $region16
      $region15: #{tpu_custom_call.1} parent=5 // pred_region
        // Predicated region
        $region17: #{tpu_custom_call.1} parent=15 // pred_check
          %p134 = pneg %p53
        $region18: #{tpu_custom_call.1} parent=15 // pred_check_branch
          %136 = sbr.rel (%p134) target = $region20
        $region19: #{tpu_custom_call.1} parent=15 // pred_region
          %s137 = sand.u32 %s43, 1
          %s138 = scalar_lea.sflag [#allocation5], %s137
          %s139 = sand.u32 %s43, 1
          %s140 = scalar_lea.vmem [#allocation4], %s139
          %s141 = smul.u32 %s24, 2
          %s142 = sadd.s32 %s141, %s25
          %144 = vsyncadd %s138, 0
          %s145 = scalar_lea.hbm %s0, %s142
          %s147 = sshll.u32 %s145, 4
          %s148 = int_to_ptr.hbm [resolvable:$true] %s147
          %s149 = sshll.u32 %s140, 4
          %s150 = int_to_ptr.vmem [resolvable:$true] %s149
          %152 = dma.hbm_to_vmem [thread:$0]  %s148, 16, %s150, %s138
        $region20: #{tpu_custom_call.1} parent=15 // pred_fallthru
          _
        // Predicated region
        $region21: #{tpu_custom_call.1} parent=15 // pred_check
          %p153 = pneg %p83
        $region22: #{tpu_custom_call.1} parent=15 // pred_check_branch
          %155 = sbr.rel (%p153) target = $region24
        $region23: #{tpu_custom_call.1} parent=15 // pred_region
          %s156 = sand.u32 %s73, 1
          %s157 = scalar_lea.sflag [#allocation8], %s156
          %s158 = sand.u32 %s73, 1
          %s159 = scalar_lea.vmem [#allocation7], %s158
          %s160 = smul.u32 %s24, 2
          %s161 = sadd.s32 %s160, %s25
          %163 = vsyncadd %s157, 0
          %s164 = scalar_lea.hbm %s1, %s161
          %s166 = sshll.u32 %s164, 4
          %s167 = int_to_ptr.hbm [resolvable:$true] %s166
          %s168 = sshll.u32 %s159, 4
          %s169 = int_to_ptr.vmem [resolvable:$true] %s168
          %171 = dma.hbm_to_vmem [thread:$0]  %s167, 16, %s169, %s157
        $region24: #{tpu_custom_call.1} parent=15 // pred_fallthru
          _
      $region16: #{tpu_custom_call.1} parent=5 // pred_fallthru
        _
      %p172 = scmp.le.s32.totalorder 1, %s17
      %p173 = scmp.lt.s32.totalorder %s17, 5
      %p174 = pnand %p172, %p173
      %p175 = pneg %p174
      // Predicated region
      $region25: #{tpu_custom_call.1} parent=5 // pred_check
        _
      $region26: #{tpu_custom_call.1} parent=5 // pred_check_branch
        %177 = sbr.rel (%p174) target = $region28
      $region27: #{tpu_custom_call.1} parent=5 // pred_region
        %s178 = ssub.s32 %s17, 1
        %s179 = sand.u32 %s46, 1
        %s180 = scalar_lea.sflag [#allocation5], %s179
        %s181 = sand.u32 %s46, 1
        %s182 = scalar_lea.vmem [#allocation4], %s181
        // Predicated region
        $region29: #{tpu_custom_call.1} parent=27 // pred_check
          %p183 = pneg %p59
        $region30: #{tpu_custom_call.1} parent=27 // pred_check_branch
          %185 = sbr.rel (%p183) target = $region32
        $region31: #{tpu_custom_call.1} parent=27 // pred_region
          %187 = dma.done %s180, 16
        $region32: #{tpu_custom_call.1} parent=27 // pred_fallthru
          _
        %s188 = sand.u32 %s76, 1
        %s189 = scalar_lea.sflag [#allocation8], %s188
        %s190 = sand.u32 %s76, 1
        %s191 = scalar_lea.vmem [#allocation7], %s190
        // Predicated region
        $region33: #{tpu_custom_call.1} parent=27 // pred_check
          %p192 = pneg %p89
        $region34: #{tpu_custom_call.1} parent=27 // pred_check_branch
          %194 = sbr.rel (%p192) target = $region36
        $region35: #{tpu_custom_call.1} parent=27 // pred_region
          %196 = dma.done %s189, 16
        $region36: #{tpu_custom_call.1} parent=27 // pred_fallthru
          _
        %s197 = sand.u32 %s46, 1
        %s198 = scalar_lea.sflag [#allocation5], %s197
        %s199 = sand.u32 %s46, 1
        %s200 = scalar_lea.vmem [#allocation4], %s199
        %p201 = pneg %p59
        %p202 = pneg %p56
        %s203 = sand.u32 %s76, 1
        %s204 = scalar_lea.sflag [#allocation8], %s203
        %s205 = sand.u32 %s76, 1
        %s206 = scalar_lea.vmem [#allocation7], %s205
        %p207 = pneg %p89
        %p208 = pneg %p86
        %p209 = pneg %p115
        %p210 = pneg %p112
        %s211 = sand.u32 %s102, 1
        %s212 = scalar_lea.sflag [#allocation6], %s211
        %s213 = sand.u32 %s102, 1
        %s214 = scalar_lea.vmem [#allocation9], %s213
        %s215 = smul.u32 %s26, 2
        %s216 = sadd.s32 %s215, %s27
        %s217 = smul.u32 %s26, 2
        %s218 = sadd.s32 %s217, %s27
        %p219 = scmp.eq.s32.totalorder %s27, 0
        // Predicated region
        $region37: #{tpu_custom_call.1} parent=27 // pred_check
          %p220 = pneg %p219
        $region38: #{tpu_custom_call.1} parent=27 // pred_check_branch
          %222 = sbr.rel (%p220) target = $region40
        $region39: #{tpu_custom_call.1} parent=27 // pred_region
          %223 = vst [vmem:[#allocation2] sm:$0x1] 0.0
          %v224 = vlaneseq
          %v225 = vshrl.u32 %v224, 7
          %v226 = vadd.s32 %v225, 8
          %v227 = vadd.s32 %v225, 16
          %v228 = vadd.s32 %v225, 24
          %v229 = vadd.s32 %v225, 32
          %v230 = vadd.s32 %v225, 40
          %v231 = vadd.s32 %v225, 48
          %v232 = vadd.s32 %v225, 56
          %v233 = vadd.s32 %v225, 64
          %v234 = vadd.s32 %v225, 72
          %v235 = vadd.s32 %v225, 80
          %v236 = vadd.s32 %v225, 88
          %v237 = vadd.s32 %v225, 96
          %v238 = vadd.s32 %v225, 104
          %v239 = vadd.s32 %v225, 112
          %v240 = vadd.s32 %v225, 120
          %241 = vst [vmem:[#allocation3] sm:$0xff] %v225
          %242 = vst [vmem:[#allocation3 + $0x8] sm:$0xff] %v226
          %243 = vst [vmem:[#allocation3 + $0x10] sm:$0xff] %v227
          %244 = vst [vmem:[#allocation3 + $0x18] sm:$0xff] %v228
          %245 = vst [vmem:[#allocation3 + $0x20] sm:$0xff] %v229
          %246 = vst [vmem:[#allocation3 + $0x28] sm:$0xff] %v230
          %247 = vst [vmem:[#allocation3 + $0x30] sm:$0xff] %v231
          %248 = vst [vmem:[#allocation3 + $0x38] sm:$0xff] %v232
          %249 = vst [vmem:[#allocation3 + $0x40] sm:$0xff] %v233
          %250 = vst [vmem:[#allocation3 + $0x48] sm:$0xff] %v234
          %251 = vst [vmem:[#allocation3 + $0x50] sm:$0xff] %v235
          %252 = vst [vmem:[#allocation3 + $0x58] sm:$0xff] %v236
          %253 = vst [vmem:[#allocation3 + $0x60] sm:$0xff] %v237
          %254 = vst [vmem:[#allocation3 + $0x68] sm:$0xff] %v238
          %255 = vst [vmem:[#allocation3 + $0x70] sm:$0xff] %v239
          %256 = vst [vmem:[#allocation3 + $0x78] sm:$0xff] %v240
        $region40: #{tpu_custom_call.1} parent=27 // pred_fallthru
          _
        %v257 = vld [vmem:[%s182] sm:$0x1]
        %v258 = vld [vmem:[%s191] sm:$0x1]
        %v259 = vld [vmem:[#allocation3] sm:$0xff]
        %v260 = vld [vmem:[#allocation3 + $0x8] sm:$0xff]
        %v261 = vld [vmem:[#allocation3 + $0x10] sm:$0xff]
        %v262 = vld [vmem:[#allocation3 + $0x18] sm:$0xff]
        %v263 = vld [vmem:[#allocation3 + $0x20] sm:$0xff]
        %v264 = vld [vmem:[#allocation3 + $0x28] sm:$0xff]
        %v265 = vld [vmem:[#allocation3 + $0x30] sm:$0xff]
        %v266 = vld [vmem:[#allocation3 + $0x38] sm:$0xff]
        %v267 = vld [vmem:[#allocation3 + $0x40] sm:$0xff]
        %v268 = vld [vmem:[#allocation3 + $0x48] sm:$0xff]
        %v269 = vld [vmem:[#allocation3 + $0x50] sm:$0xff]
        %v270 = vld [vmem:[#allocation3 + $0x58] sm:$0xff]
        %v271 = vld [vmem:[#allocation3 + $0x60] sm:$0xff]
        %v272 = vld [vmem:[#allocation3 + $0x68] sm:$0xff]
        %v273 = vld [vmem:[#allocation3 + $0x70] sm:$0xff]
        %v274 = vld [vmem:[#allocation3 + $0x78] sm:$0xff]
        %v275 = vperm.slane %v258, 0
        %vm276 = vcmp.eq.s32.totalorder %v275, %v259
        %vm277 = vcmp.eq.s32.totalorder %v275, %v260
        %vm278 = vcmp.eq.s32.totalorder %v275, %v261
        %vm279 = vcmp.eq.s32.totalorder %v275, %v262
        %vm280 = vcmp.eq.s32.totalorder %v275, %v263
        %vm281 = vcmp.eq.s32.totalorder %v275, %v264
        %vm282 = vcmp.eq.s32.totalorder %v275, %v265
        %vm283 = vcmp.eq.s32.totalorder %v275, %v266
        %vm284 = vcmp.eq.s32.totalorder %v275, %v267
        %vm285 = vcmp.eq.s32.totalorder %v275, %v268
        %vm286 = vcmp.eq.s32.totalorder %v275, %v269
        %vm287 = vcmp.eq.s32.totalorder %v275, %v270
        %vm288 = vcmp.eq.s32.totalorder %v275, %v271
        %vm289 = vcmp.eq.s32.totalorder %v275, %v272
        %vm290 = vcmp.eq.s32.totalorder %v275, %v273
        %vm291 = vcmp.eq.s32.totalorder %v275, %v274
        %v292 = vsel %vm276, 1, 0
        %v293 = vsel %vm277, 1, 0
        %v294 = vsel %vm278, 1, 0
        %v295 = vsel %vm279, 1, 0
        %v296 = vsel %vm280, 1, 0
        %v297 = vsel %vm281, 1, 0
        %v298 = vsel %vm282, 1, 0
        %v299 = vsel %vm283, 1, 0
        %v300 = vsel %vm284, 1, 0
        %v301 = vsel %vm285, 1, 0
        %v302 = vsel %vm286, 1, 0
        %v303 = vsel %vm287, 1, 0
        %v304 = vsel %vm288, 1, 0
        %v305 = vsel %vm289, 1, 0
        %v306 = vsel %vm290, 1, 0
        %v307 = vsel %vm291, 1, 0
        %v308 = vcvt.s32.f32 %v292
        %v309 = vcvt.s32.f32 %v293
        %v310 = vcvt.s32.f32 %v294
        %v311 = vcvt.s32.f32 %v295
        %v312 = vcvt.s32.f32 %v296
        %v313 = vcvt.s32.f32 %v297
        %v314 = vcvt.s32.f32 %v298
        %v315 = vcvt.s32.f32 %v299
        %v316 = vcvt.s32.f32 %v300
        %v317 = vcvt.s32.f32 %v301
        %v318 = vcvt.s32.f32 %v302
        %v319 = vcvt.s32.f32 %v303
        %v320 = vcvt.s32.f32 %v304
        %v321 = vcvt.s32.f32 %v305
        %v322 = vcvt.s32.f32 %v306
        %v323 = vcvt.s32.f32 %v307
        %v324 = vld [vmem:[#allocation2] sm:$0x1]
        %325 = vmatpush.xpose.msra.mxu0 %v323
        %326 = vmatpush.xpose.msra.mxu0 %v322
        %327 = vmatpush.xpose.msra.mxu0 %v321
        %328 = vmatpush.xpose.msra.mxu0 %v320
        %329 = vmatpush.xpose.msra.mxu0 %v319
        %330 = vmatpush.xpose.msra.mxu0 %v318
        %331 = vmatpush.xpose.msra.mxu0 %v317
        %332 = vmatpush.xpose.msra.mxu0 %v316
        %333 = vmatpush.xpose.msra.mxu0 %v315
        %334 = vmatpush.xpose.msra.mxu0 %v314
        %335 = vmatpush.xpose.msra.mxu0 %v313
        %336 = vmatpush.xpose.msra.mxu0 %v312
        %337 = vmatpush.xpose.msra.mxu0 %v311
        %338 = vmatpush.xpose.msra.mxu0 %v310
        %339 = vmatpush.xpose.msra.mxu0 %v309
        %340 = vmatpush.xpose.msra.mxu0 %v308
        %341 = vmatmul.f32.gmra.mxu0 %v257
        %v342 = vpop.f32.mrf.mxu0
        %v343 = vadd.f32 0.0, %v342
        %344 = vdwg.mxu0
        %v345 = vadd.f32 %v324, %v343
        %346 = vst [vmem:[#allocation2] sm:$0x1] %v345
        %p347 = scmp.eq.s32.totalorder %s27, 1
        // Predicated region
        $region41: #{tpu_custom_call.1} parent=27 // pred_check
          %p348 = pneg %p347
        $region42: #{tpu_custom_call.1} parent=27 // pred_check_branch
          %350 = sbr.rel (%p348) target = $region44
        $region43: #{tpu_custom_call.1} parent=27 // pred_region
          %v351 = vld [vmem:[#allocation2] sm:$0x1]
          %v352 = vmul.f32 %v351, 0.5
          %353 = vst [vmem:[%s214] sm:$0x1] %v352
        $region44: #{tpu_custom_call.1} parent=27 // pred_fallthru
          _
        %s354 = sand.u32 %s102, 1
        %s355 = scalar_lea.sflag [#allocation6], %s354
        %s356 = sand.u32 %s102, 1
        %s357 = scalar_lea.vmem [#allocation9], %s356
        // Predicated region
        $region45: #{tpu_custom_call.1} parent=27 // pred_check
          %p358 = pneg %p112
        $region46: #{tpu_custom_call.1} parent=27 // pred_check_branch
          %360 = sbr.rel (%p358) target = $region48
        $region47: #{tpu_custom_call.1} parent=27 // pred_region
          %362 = vsyncadd %s355, 0
          %s363 = scalar_lea.hbm %s2, %s26
          %s365 = sshll.u32 %s357, 4
          %s366 = int_to_ptr.vmem [resolvable:$true] %s365
          %s367 = sshll.u32 %s363, 4
          %s368 = int_to_ptr.hbm [resolvable:$true] %s367
          %370 = dma.vmem_to_hbm [thread:$0]  %s366, 16, %s368, %s355
        $region48: #{tpu_custom_call.1} parent=27 // pred_fallthru
          _
      $region28: #{tpu_custom_call.1} parent=5 // pred_fallthru
        _
      %p371 = scmp.le.s32.totalorder 2, %s17
      // Predicated region
      $region49: #{tpu_custom_call.1} parent=5 // pred_check
        %p372 = pneg %p371
      $region50: #{tpu_custom_call.1} parent=5 // pred_check_branch
        %374 = sbr.rel (%p372) target = $region52
      $region51: #{tpu_custom_call.1} parent=5 // pred_region
        %s375 = ssub.s32 %s17, 2
        // Predicated region
        $region53: #{tpu_custom_call.1} parent=51 // pred_check
          %p376 = pneg %p118
        $region54: #{tpu_custom_call.1} parent=51 // pred_check_branch
          %378 = sbr.rel (%p376) target = $region56
        $region55: #{tpu_custom_call.1} parent=51 // pred_region
          %s379 = sand.u32 %s103, 1
          %s380 = scalar_lea.sflag [#allocation6], %s379
          %s381 = sand.u32 %s103, 1
          %s382 = scalar_lea.vmem [#allocation9], %s381
          %384 = dma.done %s380, 16
        $region56: #{tpu_custom_call.1} parent=51 // pred_fallthru
          _
      $region52: #{tpu_custom_call.1} parent=5 // pred_fallthru
        _
    $region6: #{tpu_custom_call.1} parent=1 // loop_footer
      %s21 = sadd.s32 1, %s17
    $region7: #{tpu_custom_call.1} parent=1 // loop_footer_branch
      %16 = sbr.rel target = $region3
    $region8: #{tpu_custom_call.1} parent=1 // loop_exit
      _
    %385 = vsyncpa [#allocation5], 1
    %s386 = scalar_lea.sflag [#allocation5], 1
    %387 = vsyncpa %s386, 1
    %388 = vsyncpa [#allocation8], 1
    %s389 = scalar_lea.sflag [#allocation8], 1
    %390 = vsyncpa %s389, 1
    %391 = vsyncpa [#allocation6], 1
    %s392 = scalar_lea.sflag [#allocation6], 1
    %393 = vsyncpa %s392, 1

</llo_original>
